<compile_context>
chip_gen: v7x
topology: tpu7x:2x2x1
jax: 0.10.0
libtpu: 0.0.40
codegen_flags: <defaults>
</compile_context>

<pallas_src>
from math import sqrt

import jax
import jax.numpy as jnp
import numpy as np
from jax.experimental import pallas as pl
from jax.experimental.pallas import tpu as pltpu


def _scale_kernel(c_ref, w_ref, o_ref):
    """o = w * c, with c read from SMEM (scalar prefetch)."""
    c = c_ref[0]
    w = w_ref[...]
    if w.dtype == jnp.bfloat16:
        # Native bf16 multiply (v6e/v7x VPU has bf16): no f32 round trip.
        o_ref[...] = w * c.astype(jnp.bfloat16)
    elif w.dtype == jnp.float32:
        o_ref[...] = w * c
    else:
        # Generic path: promote to f32 for the multiply, cast back.
        o_ref[...] = (w.astype(jnp.float32) * c).astype(o_ref.dtype)


def equalized_weight_forward(
    weight: jax.Array,
    *,
    target_block_bytes: int = 4 << 20,   # ~4 MiB blocks (16 MiB double-buffered)
    max_cols: int = 2048,                # cap on the lane-dense slab width
) -> jax.Array:
    """Compute weight * (1/sqrt(prod(shape[1:]))) with a Pallas TPU kernel."""
    shape = weight.shape
    c = 1.0 / sqrt(float(np.prod(shape[1:])))   # np.prod(()) == 1.0
    n = int(np.prod(shape))
    dtype = weight.dtype
    itemsize = jnp.dtype(dtype).itemsize

    # ---- Choose a lane-dense [rows, cols] slab ------------------------------
    # Prefer a `cols` (multiple of 128) that exactly divides n: the reshape of
    # a contiguous array is then a free metadata op and no pad / slice HBM
    # round trips are needed.
    cols = 0
    cand = (min(max_cols, n) // 128) * 128
    while cand >= 128:
        if n % cand == 0:
            cols = cand
            break
        cand -= 128

    padded = cols == 0
    if padded:
        # Fallback for pathological sizes (n not a multiple of 128).
        cols = min(512, ((n + 127) // 128) * 128)
        rows = -(-n // cols)
        flat = jnp.pad(weight.reshape(-1), (0, rows * cols - n))
    else:
        rows = n // cols
        flat = weight.reshape(-1)
    w2d = flat.reshape(rows, cols)

    # ---- Pick the row-block size --------------------------------------------
    if rows < 8:
        # Block spans the full (sub-8) row extent: allowed since it equals the
        # array dim.
        tile_rows = rows
    else:
        target_rows = max(8, (target_block_bytes // (cols * itemsize)) // 8 * 8)
        tile_rows = min(target_rows, ((rows + 7) // 8) * 8)
        # Medium/large weights: keep >= 2 grid steps so both of v7x's
        # TensorCores can stream the "parallel" axis.
        if n * itemsize >= (1 << 20) and rows >= 16:
            half_rows = (((rows + 1) // 2) + 7) // 8 * 8
            tile_rows = max(8, min(tile_rows, half_rows))

    grid = (pl.cdiv(rows, tile_rows),)

    # Scale passed through SMEM (scalar prefetch): no per-layer recompile just
    # because c differs.
    c_arr = jnp.asarray([c], dtype=jnp.float32)

    out2d = pl.pallas_call(
        _scale_kernel,
        out_shape=jax.ShapeDtypeStruct((rows, cols), dtype),
        grid_spec=pltpu.PrefetchScalarGridSpec(
            num_scalar_prefetch=1,
            grid=grid,
            in_specs=[pl.BlockSpec((tile_rows, cols), lambda i, c_sref: (i, 0))],
            out_specs=pl.BlockSpec((tile_rows, cols), lambda i, c_sref: (i, 0)),
        ),
        compiler_params=pltpu.CompilerParams(
            dimension_semantics=("parallel",),
            vmem_limit_bytes=40 * 1024 * 1024,
        ),
        cost_estimate=pl.CostEstimate(
            flops=rows * cols,
            transcendentals=0,
            bytes_accessed=2 * rows * cols * itemsize,
        ),
    )(c_arr, w2d)

    if padded:
        return out2d.reshape(-1)[:n].reshape(shape)
    return out2d.reshape(shape)


if __name__ == "__main__":
    key = jax.random.PRNGKey(0)
    k1, k2, k3, k4 = jax.random.split(key, 4)

    def ref_scale(w):
        cc = 1.0 / sqrt(float(np.prod(w.shape[1:])))
        return np.asarray(w, dtype=np.float32) * cc

    # 1) Linear-style weight [out_features, in_features] — copy-free slab.
    w_lin = jax.random.normal(k1, (64, 128), dtype=jnp.float32)
    out_lin = jax.block_until_ready(equalized_weight_forward(w_lin))
    np.testing.assert_allclose(
        np.asarray(out_lin), ref_scale(w_lin), rtol=1e-6, atol=1e-6
    )

    # 2) Conv-style weight [O, I, kH, kW] — 4-D flatten, still copy-free
    #    (numel is a multiple of 128).
    w_conv = jax.random.normal(k2, (16, 8, 3, 3), dtype=jnp.float32)
    out_conv = jax.block_until_ready(equalized_weight_forward(w_conv))
    np.testing.assert_allclose(
        np.asarray(out_conv), ref_scale(w_conv), rtol=1e-6, atol=1e-6
    )

    # 3) Odd size (numel % 128 != 0) — exercises the padded fallback path.
    w_odd = jax.random.normal(k3, (5, 7, 3), dtype=jnp.float32)
    out_odd = jax.block_until_ready(equalized_weight_forward(w_odd))
    np.testing.assert_allclose(
        np.asarray(out_odd), ref_scale(w_odd), rtol=1e-6, atol=1e-6
    )

    # 4) bf16 weight with a multi-step grid and a partial (masked) final block.
    w_bf = jax.random.normal(k4, (136, 256), dtype=jnp.bfloat16)
    out_bf = jax.block_until_ready(
        equalized_weight_forward(w_bf, target_block_bytes=64 << 10)
    )
    np.testing.assert_allclose(
        np.asarray(out_bf, dtype=np.float32), ref_scale(w_bf),
        rtol=2e-2, atol=2e-2,
    )

    print("KERNEL_OK")
</pallas_src>

<mosaic_0001>
module attributes {stable_mosaic.version = 11 : i64} {
  func.func @_scale_kernel(%arg0: i32, %arg1: memref<1xf32, #tpu.memory_space<smem>>, %arg2: memref<4x2048xf32, #tpu.memory_space<vmem>>, %arg3: memref<4x2048xf32, #tpu.memory_space<vmem>>) attributes {dimension_semantics = [#tpu.dimension_semantics<parallel>], iteration_bounds = array<i64: 1>, scalar_prefetch = 1 : i64, scratch_operands = 0 : i64, tpu.core_type = #tpu.core_type<tc>, window_params = [{transform_indices = @transform_0, window_bounds = array<i64: 4, 2048>}, {transform_indices = @transform_1, window_bounds = array<i64: 4, 2048>}]} {
    %c0 = arith.constant 0 : index
    %0 = memref.load %arg1[%c0] : memref<1xf32, #tpu.memory_space<smem>>
    %c0_0 = arith.constant 0 : index
    %c0_1 = arith.constant 0 : index
    %1 = vector.load %arg2[%c0_0, %c0_1] : memref<4x2048xf32, #tpu.memory_space<vmem>>, vector<4x2048xf32>
    %2 = vector.broadcast %0 : f32 to vector<4x2048xf32>
    %3 = arith.mulf %1, %2 : vector<4x2048xf32>
    %c0_2 = arith.constant 0 : index
    %c0_3 = arith.constant 0 : index
    %4 = vector.load %arg3[%c0_2, %c0_3] : memref<4x2048xf32, #tpu.memory_space<vmem>>, vector<4x2048xf32>
    tpu.vector_store %arg3[%c0_2, %c0_3], %3 {strides = array<i32>} : memref<4x2048xf32, #tpu.memory_space<vmem>>, vector<4x2048xf32>,
    return
  }
  func.func @transform_0(%arg0: i32, %arg1: memref<1xf32, #tpu.memory_space<smem>>) -> (i32, i32) {
    %c0_i32 = arith.constant 0 : i32
    %c0_i32_0 = arith.constant 0 : i32
    return %arg0, %c0_i32 : i32, i32
  }
  func.func @transform_1(%arg0: i32, %arg1: memref<1xf32, #tpu.memory_space<smem>>) -> (i32, i32) {
    %c0_i32 = arith.constant 0 : i32
    %c0_i32_0 = arith.constant 0 : i32
    return %arg0, %c0_i32 : i32, i32
  }
}

</mosaic_0001>

<llo_original>
// kernel: tpu_custom_call.1
$region0: #{tpu_custom_call.1}
  #allocation0 [shape = 'u32[]', space=smem, size = 0x4, offset = 0x4, fixed_abs, tag = 'smem constant byte address 0x4 - core index']
  #allocation1 [shape = 'u32[144,128]{1,0:T(1,128)}', space=vmem, size = 0x12000, scoped, tag = 'internal scratch']
  #allocation2 [shape = 's32[1]{0}', space=sflag, size = 0x4, scoped, tag = 'scoped memory for tpu_custom_call.1']
  #allocation3 [shape = 'f32[1]{0:T(128)S(6)}', space=smem, size = 0x200, scoped, tag = 'prefetched SMEM operand 0']
  %s0 = inlined_call_operand.<no memory space> [shape: f32[1], index: 0, kind: input, shape index: {}]
  %s1 = inlined_call_operand.hbm [shape: f32[4,2048], index: 1, kind: input, shape index: {}]
  %s2 = inlined_call_operand.hbm [shape: f32[4,2048], index: 2, kind: output, shape index: {}]
  %s3 = sld [smem:[#allocation0]]
  $region18: #{tpu_custom_call.1} parent=0
    _
  %s5 = ssub.s32 1, %s3
  %s6 = scalar_select 0, %s5, %s3
  %7 = sst [smem:[#allocation3]] %s0
  $region1: #{tpu_custom_call.1} parent=0
    #allocation4 [shape = 'u8[32768]{0}', space=vmem, size = 0x8000, scoped, tag = 'input window, operand 1, single buffered']
    #allocation5 [shape = 's32[1]{0}', space=sflag, size = 0x4, scoped, tag = 'scoped memory for tpu_custom_call.1']
    #allocation6 [shape = 's32[1]{0}', space=sflag, size = 0x4, scoped, tag = 'scoped memory for tpu_custom_call.1']
    #allocation7 [shape = 'u8[32768]{0}', space=vmem, size = 0x8000, scoped, tag = 'output window, operand 0, single buffered']
    %8 = vsyncpa [#allocation5], 0
    %9 = vsyncpa [#allocation6], 0
    // Predicated region
    $region2: #{tpu_custom_call.1} parent=1 // pred_check
      _
    $region3: #{tpu_custom_call.1} parent=1 // pred_check_branch
      %11 = sbr.rel (0) target = $region5
    $region4: #{tpu_custom_call.1} parent=1 // pred_region
      %s13 = ssub.s32 1024, 1024
      %14 = vsyncadd [#allocation5], %s13
      %s16 = sshll.u32 [#allocation4], 4
      %s17 = int_to_ptr.vmem [resolvable:$true] %s16
      %19 = dma.hbm_to_vmem [thread:$0]  %s1, 1024, %s17, [#allocation5]
    $region5: #{tpu_custom_call.1} parent=1 // pred_fallthru
      _
    // Predicated region
    $region6: #{tpu_custom_call.1} parent=1 // pred_check
      _
    $region7: #{tpu_custom_call.1} parent=1 // pred_check_branch
      %21 = sbr.rel (0) target = $region9
    $region8: #{tpu_custom_call.1} parent=1 // pred_region
      %22 = dma.done [#allocation5], 1024
    $region9: #{tpu_custom_call.1} parent=1 // pred_fallthru
      _
    %s23 = sld [smem:[#allocation3]]
    %v24 = vld [vmem:[#allocation4] sm:$0xff]
    %v25 = vld [vmem:[#allocation4 + $0x8] sm:$0xff]
    %v26 = vld [vmem:[#allocation4 + $0x10] sm:$0xff]
    %v27 = vld [vmem:[#allocation4 + $0x18] sm:$0xff]
    %v28 = vld [vmem:[#allocation4 + $0x20] sm:$0xff]
    %v29 = vld [vmem:[#allocation4 + $0x28] sm:$0xff]
    %v30 = vld [vmem:[#allocation4 + $0x30] sm:$0xff]
    %v31 = vld [vmem:[#allocation4 + $0x38] sm:$0xff]
    %v32 = vstv %s23
    %v33 = vmul.f32 %v24, %v32
    %v34 = vmul.f32 %v25, %v32
    %v35 = vmul.f32 %v26, %v32
    %v36 = vmul.f32 %v27, %v32
    %v37 = vmul.f32 %v28, %v32
    %v38 = vmul.f32 %v29, %v32
    %v39 = vmul.f32 %v30, %v32
    %v40 = vmul.f32 %v31, %v32
    %41 = vst [vmem:[#allocation7] sm:$0xff] %v33
    %42 = vst [vmem:[#allocation7 + $0x8] sm:$0xff] %v34
    %43 = vst [vmem:[#allocation7 + $0x10] sm:$0xff] %v35
    %44 = vst [vmem:[#allocation7 + $0x18] sm:$0xff] %v36
    %45 = vst [vmem:[#allocation7 + $0x20] sm:$0xff] %v37
    %46 = vst [vmem:[#allocation7 + $0x28] sm:$0xff] %v38
    %47 = vst [vmem:[#allocation7 + $0x30] sm:$0xff] %v39
    %48 = vst [vmem:[#allocation7 + $0x38] sm:$0xff] %v40
    // Predicated region
    $region10: #{tpu_custom_call.1} parent=1 // pred_check
      _
    $region11: #{tpu_custom_call.1} parent=1 // pred_check_branch
      %50 = sbr.rel (0) target = $region13
    $region12: #{tpu_custom_call.1} parent=1 // pred_region
      %s52 = ssub.s32 1024, 1024
      %53 = vsyncadd [#allocation6], %s52
      %s55 = sshll.u32 [#allocation7], 4
      %s56 = int_to_ptr.vmem [resolvable:$true] %s55
      %58 = dma.vmem_to_hbm [thread:$0]  %s56, 1024, %s2, [#allocation6]
    $region13: #{tpu_custom_call.1} parent=1 // pred_fallthru
      _
    // Predicated region
    $region14: #{tpu_custom_call.1} parent=1 // pred_check
      _
    $region15: #{tpu_custom_call.1} parent=1 // pred_check_branch
      %60 = sbr.rel (0) target = $region17
    $region16: #{tpu_custom_call.1} parent=1 // pred_region
      %61 = dma.done [#allocation6], 1024
    $region17: #{tpu_custom_call.1} parent=1 // pred_fallthru
      _
    %62 = vsyncpa [#allocation5], 1
    %63 = vsyncpa [#allocation6], 1

</llo_original>
